<compile_context>
chip_gen: v6e
topology: v6e:2x2x1
jax: 0.10.0
libtpu: 0.0.40
codegen_flags: <defaults>
</compile_context>

<pallas_src>
import functools

import jax
import jax.numpy as jnp
import numpy as np
from jax.experimental import pallas as pl
from jax.experimental.pallas import tpu as pltpu

_LANE = 128


def _vmem_budget():
    """Per-generation (block_bytes_target, vmem_limit_cap)."""
    try:
        phys_vmem = pltpu.get_tpu_info().vmem_capacity_bytes
    except Exception:  # off-TPU tracing / older jax: assume v5e/v6e class
        phys_vmem = 128 << 20
    if phys_vmem <= (64 << 20):
        # v7x-class: only 64 MiB physical VMEM per TensorCore.
        # ~6 MiB blocks -> 24 MiB double-buffered (in+out); cap well under phys.
        return 6 << 20, 48 << 20
    # v5e / v6e: 128 MiB physical VMEM.
    # ~8 MiB blocks -> 32 MiB double-buffered; leave plenty of headroom.
    return 8 << 20, 64 << 20


def _heaviside_kernel(x_ref, o_ref, *, x2):
    x = x_ref[...]
    ones = jnp.ones_like(x)
    zeros = jnp.zeros_like(x)
    at_zero = jnp.full_like(x, x2)
    # x > 0 -> 1 ; x < 0 -> 0 ; x == 0 (and NaN, temporarily) -> x2
    y = jnp.where(x > 0, ones, jnp.where(x < 0, zeros, at_zero))
    if jnp.issubdtype(x_ref.dtype, jnp.floating):
        # np.heaviside propagates NaN; override the x2 branch for NaN inputs.
        y = jnp.where(jnp.isnan(x), x, y)
    o_ref[...] = y


def heaviside(x: jax.Array, x2: float, *, donate: bool = False) -> jax.Array:
    """Elementwise Heaviside step function with value `x2` at x == 0."""
    x2 = float(x2)
    orig_shape = x.shape
    total = int(x.size)
    itemsize = jnp.dtype(x.dtype).itemsize

    target_block_bytes, vmem_cap = _vmem_budget()
    # Sublane packing multiple: 8 for f32, 16 for bf16, 32 for int8/fp8.
    sub = max(8, 32 // itemsize)

    padded = False
    if total % _LANE == 0:
        # Widest lane-dense last dim that divides the flat size
        # (fewer, fatter grid steps; full unmasked vector stores).
        cols = _LANE
        for c in (4096, 2048, 1024, 512, 256):
            if total % c == 0:
                cols = c
                break
        rows = total // cols
        flat = x.reshape(rows, cols)

        # Row tile sized to the per-generation block budget, sublane-aligned.
        tile_rows = max(sub, (target_block_bytes // (cols * itemsize)) // sub * sub)
        if tile_rows >= rows:
            if rows >= 2 * sub:
                # Keep at least 2 grid steps so megacore (v7x) can shard them.
                tile_rows = max(sub, (rows // 2) // sub * sub)
            else:
                tile_rows = rows  # full extent; tiny input
    elif 4 * total * itemsize + (2 << 20) <= vmem_cap:
        # Ragged (not a multiple of 128) but small: single full-extent block.
        # The compiler masks the tail store -- no pad / slice extra HBM pass.
        rows, cols = 1, total
        flat = x.reshape(rows, cols)
        tile_rows = 1
    else:
        # TODO(synk): handle a large ragged tail with an in-kernel masked store
        # instead of this pad + slice wrapper (costs an extra HBM pass).
        pad = (-total) % _LANE
        cols = _LANE
        rows = (total + pad) // cols
        flat = jnp.pad(x.reshape(-1), (0, pad)).reshape(rows, cols)
        padded = True
        tile_rows = max(sub, (target_block_bytes // (cols * itemsize)) // sub * sub)
        if tile_rows >= rows:
            if rows >= 2 * sub:
                tile_rows = max(sub, (rows // 2) // sub * sub)
            else:
                tile_rows = rows

    grid = (pl.cdiv(rows, tile_rows),)
    block_bytes = tile_rows * cols * itemsize
    # in + out, double-buffered = 4x block bytes; add small headroom, cap per gen.
    vmem_limit = int(min(vmem_cap, max(32 << 20, 4 * block_bytes + (4 << 20))))

    kernel = functools.partial(_heaviside_kernel, x2=x2)

    extra_kwargs = {}
    if donate:
        # Same HBM traffic, but reuses x's buffer for the output when the
        # caller can donate it (avoids a second full-size HBM allocation).
        extra_kwargs["input_output_aliases"] = {0: 0}

    out_flat = pl.pallas_call(
        kernel,
        out_shape=jax.ShapeDtypeStruct((rows, cols), flat.dtype),
        grid=grid,
        in_specs=[pl.BlockSpec((tile_rows, cols), lambda i: (i, 0))],
        out_specs=pl.BlockSpec((tile_rows, cols), lambda i: (i, 0)),
        compiler_params=pltpu.CompilerParams(
            dimension_semantics=("parallel",),
            vmem_limit_bytes=vmem_limit,
        ),
        cost_estimate=pl.CostEstimate(
            flops=2 * total,
            transcendentals=0,
            bytes_accessed=2 * total * itemsize,
        ),
        **extra_kwargs,
    )(flat)

    if padded:
        out = out_flat.reshape(-1)[:total].reshape(orig_shape)
    else:
        out = out_flat.reshape(orig_shape)
    return out


if __name__ == "__main__":
    key = jax.random.PRNGKey(0)
    x2 = 0.5

    # NCHW input consistent with a conv-style activation module.
    x = jax.random.normal(key, (2, 4, 16, 16), dtype=jnp.float32)
    # Inject exact zeros so the x == 0 -> x2 branch is exercised.
    x = x.at[0, 0, 0, :4].set(0.0)

    y = jax.block_until_ready(heaviside(x, x2))
    y_ref = jnp.asarray(np.heaviside(np.asarray(x), np.float32(x2)))
    assert y.shape == x.shape and y.dtype == x.dtype
    assert jnp.array_equal(y, y_ref), "mismatch vs np.heaviside reference (main path)"

    # Ragged (non-multiple-of-128) path: single full-extent block, no pad pass.
    xr = jax.random.normal(jax.random.PRNGKey(1), (3, 5, 7), dtype=jnp.float32)
    xr = xr.at[0, 0, 0].set(0.0)
    yr = jax.block_until_ready(heaviside(xr, x2))
    yr_ref = jnp.asarray(np.heaviside(np.asarray(xr), np.float32(x2)))
    assert jnp.array_equal(yr, yr_ref), "mismatch vs np.heaviside reference (ragged path)"

    print("KERNEL_OK")
</pallas_src>

<mosaic_0001>
module attributes {stable_mosaic.version = 11 : i64} {
  func.func @_heaviside_kernel(%arg0: i32, %arg1: memref<1x2048xf32, #tpu.memory_space<vmem>>, %arg2: memref<1x2048xf32, #tpu.memory_space<vmem>>) attributes {dimension_semantics = [#tpu.dimension_semantics<parallel>], iteration_bounds = array<i64: 1>, scalar_prefetch = 0 : i64, scratch_operands = 0 : i64, tpu.core_type = #tpu.core_type<tc>, window_params = [{transform_indices = @transform_0, window_bounds = array<i64: 1, 2048>}, {transform_indices = @transform_1, window_bounds = array<i64: 1, 2048>}]} {
    %c0 = arith.constant 0 : index
    %c0_0 = arith.constant 0 : index
    %0 = vector.load %arg1[%c0, %c0_0] : memref<1x2048xf32, #tpu.memory_space<vmem>>, vector<1x2048xf32>
    %cst = arith.constant 1.000000e+00 : f32
    %1 = vector.broadcast %cst : f32 to vector<1x2048xf32>
    %cst_1 = arith.constant 0.000000e+00 : f32
    %2 = vector.broadcast %cst_1 : f32 to vector<1x2048xf32>
    %cst_2 = arith.constant 5.000000e-01 : f32
    %3 = vector.broadcast %cst_2 : f32 to vector<1x2048xf32>
    %cst_3 = arith.constant 0.000000e+00 : f32
    %4 = vector.broadcast %cst_3 : f32 to vector<1x2048xf32>
    %5 = arith.cmpf ogt, %0, %4 : vector<1x2048xf32>
    %cst_4 = arith.constant 0.000000e+00 : f32
    %6 = vector.broadcast %cst_4 : f32 to vector<1x2048xf32>
    %7 = arith.cmpf olt, %0, %6 : vector<1x2048xf32>
    %8 = arith.select %7, %2, %3 : vector<1x2048xi1>, vector<1x2048xf32>
    %9 = arith.select %5, %1, %8 : vector<1x2048xi1>, vector<1x2048xf32>
    %10 = arith.cmpf one, %0, %0 : vector<1x2048xf32>
    %11 = arith.select %10, %0, %9 : vector<1x2048xi1>, vector<1x2048xf32>
    %c0_5 = arith.constant 0 : index
    %c0_6 = arith.constant 0 : index
    %12 = vector.load %arg2[%c0_5, %c0_6] : memref<1x2048xf32, #tpu.memory_space<vmem>>, vector<1x2048xf32>
    tpu.vector_store %arg2[%c0_5, %c0_6], %11 {strides = array<i32>} : memref<1x2048xf32, #tpu.memory_space<vmem>>, vector<1x2048xf32>,
    return
  }
  func.func @transform_0(%arg0: i32) -> (i32, i32) {
    %c0_i32 = arith.constant 0 : i32
    %c0_i32_0 = arith.constant 0 : i32
    return %arg0, %c0_i32 : i32, i32
  }
  func.func @transform_1(%arg0: i32) -> (i32, i32) {
    %c0_i32 = arith.constant 0 : i32
    %c0_i32_0 = arith.constant 0 : i32
    return %arg0, %c0_i32 : i32, i32
  }
}

</mosaic_0001>

<llo_original>
// kernel: tpu_custom_call.1
$region0: #{tpu_custom_call.1}
  #allocation0 [shape = 'u32[]', space=smem, size = 0x4, offset = 0x4, fixed_abs, tag = 'smem constant byte address 0x4 - core index']
  #allocation1 [shape = 'u32[144,128]{1,0:T(1,128)}', space=vmem, size = 0x12000, scoped, tag = 'internal scratch']
  %s0 = inlined_call_operand.hbm [shape: f32[1,2048], index: 0, kind: input, shape index: {}]
  %s1 = inlined_call_operand.hbm [shape: f32[1,2048], index: 1, kind: output, shape index: {}]
  %s2 = sld [smem:[#allocation0]]
  $region18: #{tpu_custom_call.1} parent=0
    _
  %s4 = ssub.s32 1, %s2
  %s5 = scalar_select 0, %s4, %s2
  $region1: #{tpu_custom_call.1} parent=0
    #allocation2 [shape = 'u8[8192]{0}', space=vmem, size = 0x2000, scoped, tag = 'input window, operand 0, single buffered']
    #allocation3 [shape = 's32[1]{0}', space=sflag, size = 0x4, scoped, tag = 'scoped memory for tpu_custom_call.1']
    #allocation4 [shape = 's32[1]{0}', space=sflag, size = 0x4, scoped, tag = 'scoped memory for tpu_custom_call.1']
    #allocation5 [shape = 'u8[8192]{0}', space=vmem, size = 0x2000, scoped, tag = 'output window, operand 0, single buffered']
    %6 = vsyncpa [#allocation3], 0
    %7 = vsyncpa [#allocation4], 0
    // Predicated region
    $region2: #{tpu_custom_call.1} parent=1 // pred_check
      _
    $region3: #{tpu_custom_call.1} parent=1 // pred_check_branch
      %9 = sbr.rel (0) target = $region5
    $region4: #{tpu_custom_call.1} parent=1 // pred_region
      %s11 = ssub.s32 256, 256
      %12 = vsyncadd [#allocation3], %s11
      %s14 = sshll.u32 [#allocation2], 4
      %s15 = int_to_ptr.vmem [resolvable:$true] %s14
      %17 = dma.hbm_to_vmem [thread:$0]  %s0, 256, %s15, [#allocation3]
    $region5: #{tpu_custom_call.1} parent=1 // pred_fallthru
      _
    // Predicated region
    $region6: #{tpu_custom_call.1} parent=1 // pred_check
      _
    $region7: #{tpu_custom_call.1} parent=1 // pred_check_branch
      %19 = sbr.rel (0) target = $region9
    $region8: #{tpu_custom_call.1} parent=1 // pred_region
      %20 = dma.done [#allocation3], 256
    $region9: #{tpu_custom_call.1} parent=1 // pred_fallthru
      _
    %v21 = vld [vmem:[#allocation2] sm:$0xff]
    %v22 = vld [vmem:[#allocation2 + $0x8] sm:$0xff]
    %vm23 = vcmp.gt.f32.partialorder %v21, 0.0
    %vm24 = vcmp.gt.f32.partialorder %v22, 0.0
    %vm25 = vcmp.lt.f32.partialorder %v21, 0.0
    %vm26 = vcmp.lt.f32.partialorder %v22, 0.0
    %v27 = vsel %vm25, 0.0, 0.5
    %v28 = vsel %vm26, 0.0, 0.5
    %v29 = vsel %vm23, 1.0, %v27
    %v30 = vsel %vm24, 1.0, %v28
    %vm31 = vcmp.ne.f32.partialorder %v21, %v21
    %vm32 = vcmp.ne.f32.partialorder %v22, %v22
    %v33 = vsel %vm31, %v21, %v29
    %v34 = vsel %vm32, %v22, %v30
    %35 = vst [vmem:[#allocation5] sm:$0xff] %v33
    %36 = vst [vmem:[#allocation5 + $0x8] sm:$0xff] %v34
    // Predicated region
    $region10: #{tpu_custom_call.1} parent=1 // pred_check
      _
    $region11: #{tpu_custom_call.1} parent=1 // pred_check_branch
      %38 = sbr.rel (0) target = $region13
    $region12: #{tpu_custom_call.1} parent=1 // pred_region
      %s40 = ssub.s32 256, 256
      %41 = vsyncadd [#allocation4], %s40
      %s43 = sshll.u32 [#allocation5], 4
      %s44 = int_to_ptr.vmem [resolvable:$true] %s43
      %46 = dma.vmem_to_hbm [thread:$0]  %s44, 256, %s1, [#allocation4]
    $region13: #{tpu_custom_call.1} parent=1 // pred_fallthru
      _
    // Predicated region
    $region14: #{tpu_custom_call.1} parent=1 // pred_check
      _
    $region15: #{tpu_custom_call.1} parent=1 // pred_check_branch
      %48 = sbr.rel (0) target = $region17
    $region16: #{tpu_custom_call.1} parent=1 // pred_region
      %49 = dma.done [#allocation4], 256
    $region17: #{tpu_custom_call.1} parent=1 // pred_fallthru
      _
    %50 = vsyncpa [#allocation3], 1
    %51 = vsyncpa [#allocation4], 1

</llo_original>
